<compile_context>
chip_gen: v5e
topology: v5e:2x2
jax: 0.10.0
libtpu: 0.0.40
codegen_flags: <defaults>
</compile_context>

<pallas_src>
import functools

import jax
import jax.numpy as jnp
from jax.experimental import pallas as pl
from jax.experimental.pallas import tpu as pltpu

_EPS = 1e-5


# ---------------------------------------------------------------------------
# Kernel 1: first ConvTranspose2d (1x1 -> 4x4, stride 1, pad 0) == one matmul
# ---------------------------------------------------------------------------
def _dense_kernel(z_ref, w_ref, o_ref):
    o_ref[...] = jnp.dot(z_ref[...], w_ref[...],
                         preferred_element_type=jnp.float32)


def dense_pallas(z_bf16, w_bf16):
    M, K = z_bf16.shape
    _, Ncols = w_bf16.shape
    return pl.pallas_call(
        _dense_kernel,
        out_shape=jax.ShapeDtypeStruct((M, Ncols), jnp.float32),
        grid_spec=pltpu.PrefetchScalarGridSpec(
            num_scalar_prefetch=0,
            grid=(1,),
            in_specs=[pl.BlockSpec((M, K), lambda i: (0, 0)),
                      pl.BlockSpec((K, Ncols), lambda i: (0, 0))],
            out_specs=pl.BlockSpec((M, Ncols), lambda i: (0, 0))),
        compiler_params=pltpu.CompilerParams(
            dimension_semantics=("arbitrary",)),
    )(z_bf16, w_bf16)


# ---------------------------------------------------------------------------
# Kernel 2: fused [BN(prev) + ReLU] -> stride-2 ConvTranspose2d (phase form)
#           -> [per-channel sum / sumsq epilogue | tanh epilogue]
#
# Input x_ref is the previous layer's *pre-BN* activation, spatially padded
# with the per-channel batch mean and flattened per image to
#   ( (H+2)*(W+2) + 2 , Cin )   rows = padded pixels, lanes = channels.
# For output phase (ph, pw) and tap (dh, dw), the needed pixels are exactly a
# contiguous row window of that matrix shifted by (ph+dh)*(W+2) + (pw+dw), so
# each tap is a plain (L, Cin) @ (Cin, Cout) MXU matmul; rows with
# (row mod (W+2)) >= W are junk, masked from the BN statistics and dropped in
# the JAX-side phase interleave.
# ---------------------------------------------------------------------------
def _phase_conv_kernel(x_ref, w_ref, mean_ref, inv_ref, y_ref,
                       s_ref=None, sq_ref=None,
                       *, H, W, Cin, Cout, last):
    Wp = W + 2                 # padded width == per-phase output row period
    L = H * Wp                 # per-phase output rows (incl. junk columns)
    mean = mean_ref[...]       # (1, Cin) f32, BN stats of the producing layer
    inv = inv_ref[...]         # (1, Cin) f32

    if not last:
        rows = jax.lax.broadcasted_iota(jnp.int32, (L, 1), 0)
        valid = ((rows % Wp) < W).astype(jnp.float32)   # mask junk columns
        s_acc = jnp.zeros((1, Cout), jnp.float32)
        sq_acc = jnp.zeros((1, Cout), jnp.float32)

    for ph in range(2):
        for pw in range(2):
            acc = None
            for dh in range(2):
                for dw in range(2):
                    shift = (ph + dh) * Wp + (pw + dw)
                    idx = ((ph * 2 + pw) * 2 + dh) * 2 + dw
                    a = x_ref[shift:shift + L, :]               # (L, Cin) f32
                    # fused BatchNorm (gamma=1, beta=0) + ReLU of prev layer;
                    # mean-padding makes padded pixels map to exactly 0.
                    a = jnp.maximum((a - mean) * inv, 0.0)
                    a = a.astype(jnp.bfloat16)
                    b = w_ref[idx * Cin:(idx + 1) * Cin, :]     # (Cin, Cout) bf16
                    d = jnp.dot(a, b, preferred_element_type=jnp.float32)
                    acc = d if acc is None else acc + d
            if last:
                acc = jnp.tanh(acc)
            y_ref[ph * 2 + pw] = acc.astype(y_ref.dtype)
            if not last:
                accm = acc * valid
                s_acc = s_acc + jnp.sum(accm, axis=0, keepdims=True)
                sq_acc = sq_acc + jnp.sum(accm * accm, axis=0, keepdims=True)

    if not last:
        s_ref[...] = s_acc
        sq_ref[...] = sq_acc


def phase_conv_pallas(xf, wt, mean, inv, *, H, W, Cin, Cout, last):
    """xf: (N, (H+2)*(W+2)+2, Cin) f32; wt: (16*Cin, Cout) bf16;
    mean/inv: (1, Cin) f32.  Returns per-phase outputs (N, 4, H*(W+2), Cout)
    (+ per-image partial BN sums / sumsqs unless `last`)."""
    N, R, _ = xf.shape
    L = H * (W + 2)
    kernel = functools.partial(_phase_conv_kernel,
                               H=H, W=W, Cin=Cin, Cout=Cout, last=last)

    in_specs = [
        pl.BlockSpec((None, R, Cin), lambda n: (n, 0, 0)),   # activation (1 image/step)
        pl.BlockSpec((16 * Cin, Cout), lambda n: (0, 0)),    # weights: loaded once, resident
        pl.BlockSpec((1, Cin), lambda n: (0, 0)),            # BN mean (prev layer)
        pl.BlockSpec((1, Cin), lambda n: (0, 0)),            # BN invstd (prev layer)
    ]
    if last:
        out_shape = jax.ShapeDtypeStruct((N, 4, L, Cout), jnp.bfloat16)
        out_specs = pl.BlockSpec((None, 4, L, Cout), lambda n: (n, 0, 0, 0))
    else:
        out_shape = (
            jax.ShapeDtypeStruct((N, 4, L, Cout), jnp.float32),
            jax.ShapeDtypeStruct((N, 1, Cout), jnp.float32),
            jax.ShapeDtypeStruct((N, 1, Cout), jnp.float32),
        )
        out_specs = (
            pl.BlockSpec((None, 4, L, Cout), lambda n: (n, 0, 0, 0)),
            pl.BlockSpec((None, 1, Cout), lambda n: (n, 0, 0)),
            pl.BlockSpec((None, 1, Cout), lambda n: (n, 0, 0)),
        )

    return pl.pallas_call(
        kernel,
        out_shape=out_shape,
        grid_spec=pltpu.PrefetchScalarGridSpec(
            num_scalar_prefetch=0,
            grid=(N,),
            in_specs=in_specs,
            out_specs=out_specs),
        compiler_params=pltpu.CompilerParams(
            dimension_semantics=("parallel",),       # batch split across TCs (v7x)
            vmem_limit_bytes=32 * 1024 * 1024),
    )(xf, wt, mean, inv)


# ---------------------------------------------------------------------------
# JAX glue (layout only, fused by XLA): phase weights, mean-padding+flatten,
# phase interleave.
# ---------------------------------------------------------------------------
def build_phase_weights(w, cout_pad):
    """w: (Cin, Cout, 4, 4) torch ConvTranspose2d layout -> (16*Cin, cout_pad) bf16.
    Row-block order: ((ph*2+pw)*2+dh)*2+dw, tap element w[:, :, 3-ph-2dh, 3-pw-2dw]."""
    cout = w.shape[1]
    mats = []
    for ph in range(2):
        for pw in range(2):
            for dh in range(2):
                for dw in range(2):
                    mats.append(w[:, :, 3 - ph - 2 * dh, 3 - pw - 2 * dw])
    wt = jnp.concatenate(mats, axis=0)
    if cout_pad > cout:
        wt = jnp.pad(wt, ((0, 0), (0, cout_pad - cout)))
    return wt.astype(jnp.bfloat16)


def pad_flatten(y, mean):
    """(N,H,W,C) pre-BN activation -> (N, (H+2)*(W+2)+2, C), spatial border
    padded with the per-channel batch mean (maps to 0 after fused BN+ReLU)."""
    N, H, W, C = y.shape
    base = jnp.broadcast_to(mean.reshape(1, 1, 1, C), (N, H + 2, W + 2, C))
    xp = base.at[:, 1:H + 1, 1:W + 1, :].set(y)
    xf = xp.reshape(N, (H + 2) * (W + 2), C)
    return jnp.pad(xf, ((0, 0), (0, 2), (0, 0)))   # 2 tail rows only feed junk cols


def interleave_phases(yp, H, W):
    """(N, 4, H*(W+2), C) phase outputs -> (N, 2H, 2W, C) (drops junk columns)."""
    N, _, _, C = yp.shape
    y = yp.reshape(N, 2, 2, H, W + 2, C)[:, :, :, :, :W, :]
    return jnp.transpose(y, (0, 3, 1, 4, 2, 5)).reshape(N, 2 * H, 2 * W, C)


# ---------------------------------------------------------------------------
# Generator forward (training-mode BatchNorm semantics: batch stats,
# biased variance, eps=1e-5, gamma=1, beta=0 -> model right after init).
# ---------------------------------------------------------------------------
def generator_forward(z_nchw, layers):
    N = z_nchw.shape[0]

    # -- layer 0: ConvTranspose2d(NZ, C1, 4, 1, 0) on a 1x1 input == matmul --
    w1, s1, p1 = layers[0]
    assert s1 == 1 and p1 == 0 and w1.shape[2] == 4
    NZ, C1 = w1.shape[0], w1.shape[1]
    z = z_nchw.reshape(N, NZ).astype(jnp.bfloat16)
    B1 = jnp.transpose(w1, (0, 2, 3, 1)).reshape(NZ, 16 * C1).astype(jnp.bfloat16)
    y1 = dense_pallas(z, B1).reshape(N, 4, 4, C1)          # pre-BN conv output

    # BN stats of layer 0 (tiny tensor -> plain JAX reduction)
    mean = jnp.mean(y1, axis=(0, 1, 2))
    var = jnp.maximum(jnp.mean(y1 * y1, axis=(0, 1, 2)) - mean * mean, 0.0)
    inv = jax.lax.rsqrt(var + _EPS)

    x, H, W = y1, 4, 4
    n_layers = len(layers)
    for li in range(1, n_layers):
        w, stride, padding = layers[li]
        assert stride == 2 and padding == 1 and w.shape[2] == 4
        Cin, Cout = w.shape[0], w.shape[1]
        last = li == n_layers - 1
        cout_pad = 128 if last else Cout                    # lane-dense final store
        wt = build_phase_weights(w, cout_pad)
        xf = pad_flatten(x, mean)
        outs = phase_conv_pallas(xf, wt, mean.reshape(1, Cin), inv.reshape(1, Cin),
                                 H=H, W=W, Cin=Cin, Cout=cout_pad, last=last)
        if last:
            img = interleave_phases(outs[..., :Cout].astype(jnp.float32), H, W)
            return jnp.transpose(img, (0, 3, 1, 2))          # NHWC -> NCHW
        yp, s_p, sq_p = outs
        cnt = N * 4 * H * W                                  # == N * OH * OW
        mean = jnp.sum(s_p, axis=(0, 1)) / cnt
        var = jnp.maximum(jnp.sum(sq_p, axis=(0, 1)) / cnt - mean * mean, 0.0)
        inv = jax.lax.rsqrt(var + _EPS)
        x = interleave_phases(yp, H, W)
        H, W = 2 * H, 2 * W


# ---------------------------------------------------------------------------
# Parameters (deterministic DCGAN-style N(0, 0.02) init) and a pure-JAX
# reference used only for verification.
# ---------------------------------------------------------------------------
def make_generator_params(key, nz, ngf, nc):
    cfg = [
        (nz,       ngf * 16, 4, 1, 0),
        (ngf * 16, ngf * 8,  4, 2, 1),
        (ngf * 8,  ngf * 4,  4, 2, 1),
        (ngf * 4,  ngf * 2,  4, 2, 1),
        (ngf * 2,  ngf,      4, 2, 1),
        (ngf,      nc,       4, 2, 1),
    ]
    layers = []
    for cin, cout, k, s, p in cfg:
        key, sub = jax.random.split(key)
        w = 0.02 * jax.random.normal(sub, (cin, cout, k, k), dtype=jnp.float32)
        layers.append((w, s, p))
    return layers


def _conv_transpose_ref(x, w, stride, padding):
    """Direct scatter-add ConvTranspose2d reference.  x: NHWC, w: (Cin,Cout,k,k)."""
    N, H, W, _ = x.shape
    k = w.shape[2]
    hfull = (H - 1) * stride + k
    wfull = (W - 1) * stride + k
    out = jnp.zeros((N, hfull, wfull, w.shape[1]), jnp.float32)
    for kh in range(k):
        for kw in range(k):
            contrib = jnp.einsum('nhwc,cd->nhwd', x, w[:, :, kh, kw])
            out = out.at[:, kh:kh + (H - 1) * stride + 1:stride,
                         kw:kw + (W - 1) * stride + 1:stride, :].add(contrib)
    if padding > 0:
        out = out[:, padding:hfull - padding, padding:wfull - padding, :]
    return out


def generator_ref(z_nchw, layers):
    x = jnp.transpose(z_nchw, (0, 2, 3, 1)).astype(jnp.float32)
    for li, (w, s, p) in enumerate(layers):
        y = _conv_transpose_ref(x, w, s, p)
        if li < len(layers) - 1:
            mean = jnp.mean(y, axis=(0, 1, 2), keepdims=True)
            var = jnp.mean((y - mean) ** 2, axis=(0, 1, 2), keepdims=True)
            y = jnp.maximum((y - mean) * jax.lax.rsqrt(var + _EPS), 0.0)
        else:
            y = jnp.tanh(y)
        x = y
    return jnp.transpose(x, (0, 3, 1, 2))


if __name__ == "__main__":
    # Small config consistent with the module (real config: NZ=100, NGF=48, NC=3).
    BATCH, NZ, NGF, NC = 2, 16, 8, 3

    key = jax.random.PRNGKey(0)
    key, kx = jax.random.split(key)
    layers = make_generator_params(key, NZ, NGF, NC)

    # Latent input, NCHW, like torch.randn(b, nz, 1, 1)
    z = jax.random.normal(kx, (BATCH, NZ, 1, 1), dtype=jnp.float32)

    out = generator_forward(z, layers)
    out = jax.block_until_ready(out)

    assert out.shape == (BATCH, NC, 128, 128), out.shape
    assert bool(jnp.all(jnp.isfinite(out)))
    assert bool(jnp.all(jnp.abs(out) <= 1.0 + 1e-5))        # tanh range

    # Verify against a pure-JAX reference (bf16 matmul operands -> loose tol).
    ref = generator_ref(z, layers)
    err = float(jnp.max(jnp.abs(out - ref)))
    assert err < 0.1, err

    print("KERNEL_OK")
</pallas_src>

<mosaic_0001>
module attributes {stable_mosaic.version = 11 : i64} {
  func.func @_dense_kernel(%arg0: i32, %arg1: memref<2x16xbf16, #tpu.memory_space<vmem>>, %arg2: memref<16x2048xbf16, #tpu.memory_space<vmem>>, %arg3: memref<2x2048xf32, #tpu.memory_space<vmem>>) attributes {dimension_semantics = [#tpu.dimension_semantics<arbitrary>], iteration_bounds = array<i64: 1>, scalar_prefetch = 0 : i64, scratch_operands = 0 : i64, tpu.core_type = #tpu.core_type<tc>, window_params = [{pipeline_mode = #tpu.pipeline_mode<synchronous>, transform_indices = @transform_0, window_bounds = array<i64: 2, 16>}, {pipeline_mode = #tpu.pipeline_mode<synchronous>, transform_indices = @transform_1, window_bounds = array<i64: 16, 2048>}, {pipeline_mode = #tpu.pipeline_mode<synchronous>, transform_indices = @transform_2, window_bounds = array<i64: 2, 2048>}]} {
    %c0 = arith.constant 0 : index
    %c0_0 = arith.constant 0 : index
    %0 = vector.load %arg1[%c0, %c0_0] : memref<2x16xbf16, #tpu.memory_space<vmem>>, vector<2x16xbf16>
    %c0_1 = arith.constant 0 : index
    %c0_2 = arith.constant 0 : index
    %1 = vector.load %arg2[%c0_1, %c0_2] : memref<16x2048xbf16, #tpu.memory_space<vmem>>, vector<16x2048xbf16>
    %cst = arith.constant dense<0.000000e+00> : vector<2x2048xf32>
    %2 = tpu.matmul %0, %1, %cst {dimension_numbers = #tpu.dot_dimension_numbers<[1], [0], [0], [1], [0, 0, 1, 1], [], []>} : vector<2x16xbf16>, vector<16x2048xbf16>, vector<2x2048xf32> -> vector<2x2048xf32>
    %c0_3 = arith.constant 0 : index
    %c0_4 = arith.constant 0 : index
    %3 = vector.load %arg3[%c0_3, %c0_4] : memref<2x2048xf32, #tpu.memory_space<vmem>>, vector<2x2048xf32>
    tpu.vector_store %arg3[%c0_3, %c0_4], %2 {strides = array<i32>} : memref<2x2048xf32, #tpu.memory_space<vmem>>, vector<2x2048xf32>,
    return
  }
  func.func @transform_0(%arg0: i32) -> (i32, i32) {
    %c0_i32 = arith.constant 0 : i32
    %c0_i32_0 = arith.constant 0 : i32
    %c0_i32_1 = arith.constant 0 : i32
    return %c0_i32, %c0_i32_0 : i32, i32
  }
  func.func @transform_1(%arg0: i32) -> (i32, i32) {
    %c0_i32 = arith.constant 0 : i32
    %c0_i32_0 = arith.constant 0 : i32
    %c0_i32_1 = arith.constant 0 : i32
    return %c0_i32, %c0_i32_0 : i32, i32
  }
  func.func @transform_2(%arg0: i32) -> (i32, i32) {
    %c0_i32 = arith.constant 0 : i32
    %c0_i32_0 = arith.constant 0 : i32
    %c0_i32_1 = arith.constant 0 : i32
    return %c0_i32, %c0_i32_0 : i32, i32
  }
}

</mosaic_0001>

<llo_original>
// kernel: tpu_custom_call.1
$region0: #{tpu_custom_call.1}
  #allocation0 [shape = 'u32[]', space=smem, size = 0x4, offset = 0x4, fixed_abs, tag = 'smem constant byte address 0x4 - core index']
  #allocation1 [shape = 'u32[72,128]{1,0:T(1,128)}', space=vmem, size = 0x9000, scoped, tag = 'internal scratch']
  %s0 = inlined_call_operand.hbm [shape: bf16[2,16], index: 0, kind: input, shape index: {}]
  %s1 = inlined_call_operand.hbm [shape: bf16[16,2048], index: 1, kind: input, shape index: {}]
  %s2 = inlined_call_operand.hbm [shape: f32[2,2048], index: 2, kind: output, shape index: {}]
  %s3 = sld [smem:[#allocation0]]
  $region26: #{tpu_custom_call.1} parent=0
    _
  %s5 = ssub.s32 1, %s3
  %s6 = scalar_select 0, %s5, %s3
  $region1: #{tpu_custom_call.1} parent=0
    #allocation2 [shape = 'u8[512]{0}', space=vmem, size = 0x400, scoped, tag = 'input window, operand 0, single buffered']
    #allocation3 [shape = 's32[1]{0}', space=sflag, size = 0x4, scoped, tag = 'scoped memory for tpu_custom_call.1']
    #allocation4 [shape = 's32[1]{0}', space=sflag, size = 0x4, scoped, tag = 'scoped memory for tpu_custom_call.1']
    #allocation5 [shape = 'u8[65536]{0}', space=vmem, size = 0x10000, scoped, tag = 'input window, operand 1, single buffered']
    #allocation6 [shape = 's32[1]{0}', space=sflag, size = 0x4, scoped, tag = 'scoped memory for tpu_custom_call.1']
    #allocation7 [shape = 'u8[16384]{0}', space=vmem, size = 0x4000, scoped, tag = 'output window, operand 0, single buffered']
    %7 = vsyncpa [#allocation3], 0
    %8 = vsyncpa [#allocation6], 0
    %9 = vsyncpa [#allocation4], 0
    // Predicated region
    $region2: #{tpu_custom_call.1} parent=1 // pred_check
      _
    $region3: #{tpu_custom_call.1} parent=1 // pred_check_branch
      %11 = sbr.rel (0) target = $region5
    $region4: #{tpu_custom_call.1} parent=1 // pred_region
      %13 = vsyncadd [#allocation3], 0
      %s15 = sshll.u32 %s0, 4
      %s16 = int_to_ptr.hbm [resolvable:$true] %s15
      %s17 = sshll.u32 [#allocation2], 4
      %s18 = int_to_ptr.vmem [resolvable:$true] %s17
      %20 = dma.hbm_to_vmem [thread:$0]  %s16, 16, %s18, [#allocation3]
    $region5: #{tpu_custom_call.1} parent=1 // pred_fallthru
      _
    // Predicated region
    $region6: #{tpu_custom_call.1} parent=1 // pred_check
      _
    $region7: #{tpu_custom_call.1} parent=1 // pred_check_branch
      %22 = sbr.rel (0) target = $region9
    $region8: #{tpu_custom_call.1} parent=1 // pred_region
      %24 = vsyncadd [#allocation6], 0
      %s25 = sshll.u32 %s1, 4
      %s26 = int_to_ptr.hbm [resolvable:$true] %s25
      %s27 = sshll.u32 [#allocation5], 4
      %s28 = int_to_ptr.vmem [resolvable:$true] %s27
      %33 = dma.hbm_to_vmem [thread:$0]  %s26, 2048, %s28, [#allocation6], 1024, 1024, 64
    $region9: #{tpu_custom_call.1} parent=1 // pred_fallthru
      _
    // Predicated region
    $region10: #{tpu_custom_call.1} parent=1 // pred_check
      _
    $region11: #{tpu_custom_call.1} parent=1 // pred_check_branch
      %35 = sbr.rel (0) target = $region13
    $region12: #{tpu_custom_call.1} parent=1 // pred_region
      %37 = dma.done [#allocation3], 16
    $region13: #{tpu_custom_call.1} parent=1 // pred_fallthru
      _
    // Predicated region
    $region14: #{tpu_custom_call.1} parent=1 // pred_check
      _
    $region15: #{tpu_custom_call.1} parent=1 // pred_check_branch
      %39 = sbr.rel (0) target = $region17
    $region16: #{tpu_custom_call.1} parent=1 // pred_region
      %41 = dma.done [#allocation6], 2048
    $region17: #{tpu_custom_call.1} parent=1 // pred_fallthru
      _
    %v43 = vld [vmem:[#allocation2] sm:$0x1]
    %v44 = vld [vmem:[#allocation5] sm:$0xff]
    %v45 = vld [vmem:[#allocation5 + $0x8] sm:$0xff]
    %v46 = vld [vmem:[#allocation5 + $0x10] sm:$0xff]
    %v47 = vld [vmem:[#allocation5 + $0x18] sm:$0xff]
    %v48 = vld [vmem:[#allocation5 + $0x20] sm:$0xff]
    %v49 = vld [vmem:[#allocation5 + $0x28] sm:$0xff]
    %v50 = vld [vmem:[#allocation5 + $0x30] sm:$0xff]
    %v51 = vld [vmem:[#allocation5 + $0x38] sm:$0xff]
    %v52 = vld [vmem:[#allocation5 + $0x40] sm:$0xff]
    %v53 = vld [vmem:[#allocation5 + $0x48] sm:$0xff]
    %v54 = vld [vmem:[#allocation5 + $0x50] sm:$0xff]
    %v55 = vld [vmem:[#allocation5 + $0x58] sm:$0xff]
    %v56 = vld [vmem:[#allocation5 + $0x60] sm:$0xff]
    %v57 = vld [vmem:[#allocation5 + $0x68] sm:$0xff]
    %v58 = vld [vmem:[#allocation5 + $0x70] sm:$0xff]
    %v59 = vld [vmem:[#allocation5 + $0x78] sm:$0xff]
    %v76 = vunpack.c.l.b16 %v44
    %v77 = vunpack.c.h.b16 %v44
    %v78 = vunpack.c.l.b16 %v45
    %v79 = vunpack.c.h.b16 %v45
    %v80 = vunpack.c.l.b16 %v46
    %v81 = vunpack.c.h.b16 %v46
    %v82 = vunpack.c.l.b16 %v47
    %v83 = vunpack.c.h.b16 %v47
    %v84 = vunpack.c.l.b16 %v48
    %v85 = vunpack.c.h.b16 %v48
    %v86 = vunpack.c.l.b16 %v49
    %v87 = vunpack.c.h.b16 %v49
    %v88 = vunpack.c.l.b16 %v50
    %v89 = vunpack.c.h.b16 %v50
    %v90 = vunpack.c.l.b16 %v51
    %v91 = vunpack.c.h.b16 %v51
    %v92 = vunpack.c.l.b16 %v52
    %v93 = vunpack.c.h.b16 %v52
    %v94 = vunpack.c.l.b16 %v53
    %v95 = vunpack.c.h.b16 %v53
    %v96 = vunpack.c.l.b16 %v54
    %v97 = vunpack.c.h.b16 %v54
    %v98 = vunpack.c.l.b16 %v55
    %v99 = vunpack.c.h.b16 %v55
    %v100 = vunpack.c.l.b16 %v56
    %v101 = vunpack.c.h.b16 %v56
    %v102 = vunpack.c.l.b16 %v57
    %v103 = vunpack.c.h.b16 %v57
    %v104 = vunpack.c.l.b16 %v58
    %v105 = vunpack.c.h.b16 %v58
    %v106 = vunpack.c.l.b16 %v59
    %v107 = vunpack.c.h.b16 %v59
    %v108 = vpack.c.b16 %v92, %v76
    %v109 = vpack.c.b16 %v93, %v77
    %v110 = vpack.c.b16 %v94, %v78
    %v111 = vpack.c.b16 %v95, %v79
    %v112 = vpack.c.b16 %v96, %v80
    %v113 = vpack.c.b16 %v97, %v81
    %v114 = vpack.c.b16 %v98, %v82
    %v115 = vpack.c.b16 %v99, %v83
    %v116 = vpack.c.b16 %v100, %v84
    %v117 = vpack.c.b16 %v101, %v85
    %v118 = vpack.c.b16 %v102, %v86
    %v119 = vpack.c.b16 %v103, %v87
    %v120 = vpack.c.b16 %v104, %v88
    %v121 = vpack.c.b16 %v105, %v89
    %v122 = vpack.c.b16 %v106, %v90
    %v123 = vpack.c.b16 %v107, %v91
    %vm140 = vcmask 130048
    %v142 = vsel %vm140, %v43, 0
    %144 = vmatpush.bf16.msra.mxu0 0
    %145 = vmatpush.bf16.msra.mxu0 0
    %146 = vmatpush.bf16.msra.mxu0 0
    %147 = vmatpush.bf16.msra.mxu0 0
    %148 = vmatpush.bf16.msra.mxu0 0
    %149 = vmatpush.bf16.msra.mxu0 0
    %150 = vmatpush.bf16.msra.mxu0 0
    %151 = vmatpush.bf16.msra.mxu0 %v108
    %152 = vmatmul.bf16.gmra.mxu0 %v142
    %v153 = vpop.f32.mrf.mxu0
    %v154 = vadd.f32 0.0, %v153
    %v155 = vpop.f32.mrf.mxu0
    %156 = vdwg.mxu0
    %157 = vmatpush.bf16.msra.mxu0 0
    %158 = vmatpush.bf16.msra.mxu0 0
    %159 = vmatpush.bf16.msra.mxu0 0
    %160 = vmatpush.bf16.msra.mxu0 0
    %161 = vmatpush.bf16.msra.mxu0 0
    %162 = vmatpush.bf16.msra.mxu0 0
    %163 = vmatpush.bf16.msra.mxu0 0
    %164 = vmatpush.bf16.msra.mxu0 %v109
    %165 = vmatmul.bf16.gmra.mxu0 %v142
    %v166 = vpop.f32.mrf.mxu0
    %v167 = vadd.f32 0.0, %v166
    %v168 = vpop.f32.mrf.mxu0
    %169 = vdwg.mxu0
    %170 = vmatpush.bf16.msra.mxu0 0
    %171 = vmatpush.bf16.msra.mxu0 0
    %172 = vmatpush.bf16.msra.mxu0 0
    %173 = vmatpush.bf16.msra.mxu0 0
    %174 = vmatpush.bf16.msra.mxu0 0
    %175 = vmatpush.bf16.msra.mxu0 0
    %176 = vmatpush.bf16.msra.mxu0 0
    %177 = vmatpush.bf16.msra.mxu0 %v110
    %178 = vmatmul.bf16.gmra.mxu0 %v142
    %v179 = vpop.f32.mrf.mxu0
    %v180 = vadd.f32 0.0, %v179
    %v181 = vpop.f32.mrf.mxu0
    %182 = vdwg.mxu0
    %183 = vmatpush.bf16.msra.mxu0 0
    %184 = vmatpush.bf16.msra.mxu0 0
    %185 = vmatpush.bf16.msra.mxu0 0
    %186 = vmatpush.bf16.msra.mxu0 0
    %187 = vmatpush.bf16.msra.mxu0 0
    %188 = vmatpush.bf16.msra.mxu0 0
    %189 = vmatpush.bf16.msra.mxu0 0
    %190 = vmatpush.bf16.msra.mxu0 %v111
    %191 = vmatmul.bf16.gmra.mxu0 %v142
    %v192 = vpop.f32.mrf.mxu0
    %v193 = vadd.f32 0.0, %v192
    %v194 = vpop.f32.mrf.mxu0
    %195 = vdwg.mxu0
    %196 = vmatpush.bf16.msra.mxu0 0
    %197 = vmatpush.bf16.msra.mxu0 0
    %198 = vmatpush.bf16.msra.mxu0 0
    %199 = vmatpush.bf16.msra.mxu0 0
    %200 = vmatpush.bf16.msra.mxu0 0
    %201 = vmatpush.bf16.msra.mxu0 0
    %202 = vmatpush.bf16.msra.mxu0 0
    %203 = vmatpush.bf16.msra.mxu0 %v112
    %204 = vmatmul.bf16.gmra.mxu0 %v142
    %v205 = vpop.f32.mrf.mxu0
    %v206 = vadd.f32 0.0, %v205
    %v207 = vpop.f32.mrf.mxu0
    %208 = vdwg.mxu0
    %209 = vmatpush.bf16.msra.mxu0 0
    %210 = vmatpush.bf16.msra.mxu0 0
    %211 = vmatpush.bf16.msra.mxu0 0
    %212 = vmatpush.bf16.msra.mxu0 0
    %213 = vmatpush.bf16.msra.mxu0 0
    %214 = vmatpush.bf16.msra.mxu0 0
    %215 = vmatpush.bf16.msra.mxu0 0
    %216 = vmatpush.bf16.msra.mxu0 %v113
    %217 = vmatmul.bf16.gmra.mxu0 %v142
    %v218 = vpop.f32.mrf.mxu0
    %v219 = vadd.f32 0.0, %v218
    %v220 = vpop.f32.mrf.mxu0
    %221 = vdwg.mxu0
    %222 = vmatpush.bf16.msra.mxu0 0
    %223 = vmatpush.bf16.msra.mxu0 0
    %224 = vmatpush.bf16.msra.mxu0 0
    %225 = vmatpush.bf16.msra.mxu0 0
    %226 = vmatpush.bf16.msra.mxu0 0
    %227 = vmatpush.bf16.msra.mxu0 0
    %228 = vmatpush.bf16.msra.mxu0 0
    %229 = vmatpush.bf16.msra.mxu0 %v114
    %230 = vmatmul.bf16.gmra.mxu0 %v142
    %v231 = vpop.f32.mrf.mxu0
    %v232 = vadd.f32 0.0, %v231
    %v233 = vpop.f32.mrf.mxu0
    %234 = vdwg.mxu0
    %235 = vmatpush.bf16.msra.mxu0 0
    %236 = vmatpush.bf16.msra.mxu0 0
    %237 = vmatpush.bf16.msra.mxu0 0
    %238 = vmatpush.bf16.msra.mxu0 0
    %239 = vmatpush.bf16.msra.mxu0 0
    %240 = vmatpush.bf16.msra.mxu0 0
    %241 = vmatpush.bf16.msra.mxu0 0
    %242 = vmatpush.bf16.msra.mxu0 %v115
    %243 = vmatmul.bf16.gmra.mxu0 %v142
    %v244 = vpop.f32.mrf.mxu0
    %v245 = vadd.f32 0.0, %v244
    %v246 = vpop.f32.mrf.mxu0
    %247 = vdwg.mxu0
    %248 = vmatpush.bf16.msra.mxu0 0
    %249 = vmatpush.bf16.msra.mxu0 0
    %250 = vmatpush.bf16.msra.mxu0 0
    %251 = vmatpush.bf16.msra.mxu0 0
    %252 = vmatpush.bf16.msra.mxu0 0
    %253 = vmatpush.bf16.msra.mxu0 0
    %254 = vmatpush.bf16.msra.mxu0 0
    %255 = vmatpush.bf16.msra.mxu0 %v116
    %256 = vmatmul.bf16.gmra.mxu0 %v142
    %v257 = vpop.f32.mrf.mxu0
    %v258 = vadd.f32 0.0, %v257
    %v259 = vpop.f32.mrf.mxu0
    %260 = vdwg.mxu0
    %261 = vmatpush.bf16.msra.mxu0 0
    %262 = vmatpush.bf16.msra.mxu0 0
    %263 = vmatpush.bf16.msra.mxu0 0
    %264 = vmatpush.bf16.msra.mxu0 0
    %265 = vmatpush.bf16.msra.mxu0 0
    %266 = vmatpush.bf16.msra.mxu0 0
    %267 = vmatpush.bf16.msra.mxu0 0
    %268 = vmatpush.bf16.msra.mxu0 %v117
    %269 = vmatmul.bf16.gmra.mxu0 %v142
    %v270 = vpop.f32.mrf.mxu0
    %v271 = vadd.f32 0.0, %v270
    %v272 = vpop.f32.mrf.mxu0
    %273 = vdwg.mxu0
    %274 = vmatpush.bf16.msra.mxu0 0
    %275 = vmatpush.bf16.msra.mxu0 0
    %276 = vmatpush.bf16.msra.mxu0 0
    %277 = vmatpush.bf16.msra.mxu0 0
    %278 = vmatpush.bf16.msra.mxu0 0
    %279 = vmatpush.bf16.msra.mxu0 0
    %280 = vmatpush.bf16.msra.mxu0 0
    %281 = vmatpush.bf16.msra.mxu0 %v118
    %282 = vmatmul.bf16.gmra.mxu0 %v142
    %v283 = vpop.f32.mrf.mxu0
    %v284 = vadd.f32 0.0, %v283
    %v285 = vpop.f32.mrf.mxu0
    %286 = vdwg.mxu0
    %287 = vmatpush.bf16.msra.mxu0 0
    %288 = vmatpush.bf16.msra.mxu0 0
    %289 = vmatpush.bf16.msra.mxu0 0
    %290 = vmatpush.bf16.msra.mxu0 0
    %291 = vmatpush.bf16.msra.mxu0 0
    %292 = vmatpush.bf16.msra.mxu0 0
    %293 = vmatpush.bf16.msra.mxu0 0
    %294 = vmatpush.bf16.msra.mxu0 %v119
    %295 = vmatmul.bf16.gmra.mxu0 %v142
    %v296 = vpop.f32.mrf.mxu0
    %v297 = vadd.f32 0.0, %v296
    %v298 = vpop.f32.mrf.mxu0
    %299 = vdwg.mxu0
    %300 = vmatpush.bf16.msra.mxu0 0
    %301 = vmatpush.bf16.msra.mxu0 0
    %302 = vmatpush.bf16.msra.mxu0 0
    %303 = vmatpush.bf16.msra.mxu0 0
    %304 = vmatpush.bf16.msra.mxu0 0
    %305 = vmatpush.bf16.msra.mxu0 0
    %306 = vmatpush.bf16.msra.mxu0 0
    %307 = vmatpush.bf16.msra.mxu0 %v120
    %308 = vmatmul.bf16.gmra.mxu0 %v142
    %v309 = vpop.f32.mrf.mxu0
    %v310 = vadd.f32 0.0, %v309
    %v311 = vpop.f32.mrf.mxu0
    %312 = vdwg.mxu0
    %313 = vmatpush.bf16.msra.mxu0 0
    %314 = vmatpush.bf16.msra.mxu0 0
    %315 = vmatpush.bf16.msra.mxu0 0
    %316 = vmatpush.bf16.msra.mxu0 0
    %317 = vmatpush.bf16.msra.mxu0 0
    %318 = vmatpush.bf16.msra.mxu0 0
    %319 = vmatpush.bf16.msra.mxu0 0
    %320 = vmatpush.bf16.msra.mxu0 %v121
    %321 = vmatmul.bf16.gmra.mxu0 %v142
    %v322 = vpop.f32.mrf.mxu0
    %v323 = vadd.f32 0.0, %v322
    %v324 = vpop.f32.mrf.mxu0
    %325 = vdwg.mxu0
    %326 = vmatpush.bf16.msra.mxu0 0
    %327 = vmatpush.bf16.msra.mxu0 0
    %328 = vmatpush.bf16.msra.mxu0 0
    %329 = vmatpush.bf16.msra.mxu0 0
    %330 = vmatpush.bf16.msra.mxu0 0
    %331 = vmatpush.bf16.msra.mxu0 0
    %332 = vmatpush.bf16.msra.mxu0 0
    %333 = vmatpush.bf16.msra.mxu0 %v122
    %334 = vmatmul.bf16.gmra.mxu0 %v142
    %v335 = vpop.f32.mrf.mxu0
    %v336 = vadd.f32 0.0, %v335
    %v337 = vpop.f32.mrf.mxu0
    %338 = vdwg.mxu0
    %339 = vmatpush.bf16.msra.mxu0 0
    %340 = vmatpush.bf16.msra.mxu0 0
    %341 = vmatpush.bf16.msra.mxu0 0
    %342 = vmatpush.bf16.msra.mxu0 0
    %343 = vmatpush.bf16.msra.mxu0 0
    %344 = vmatpush.bf16.msra.mxu0 0
    %345 = vmatpush.bf16.msra.mxu0 0
    %346 = vmatpush.bf16.msra.mxu0 %v123
    %347 = vmatmul.bf16.gmra.mxu0 %v142
    %v348 = vpop.f32.mrf.mxu0
    %v349 = vadd.f32 0.0, %v348
    %v350 = vpop.f32.mrf.mxu0
    %351 = vdwg.mxu0
    %v368 = vrot.slane %v167, 6
    %v369 = vrot.slane %v180, 4
    %v370 = vrot.slane %v193, 2
    %v371 = vrot.slane %v219, 6
    %v372 = vrot.slane %v232, 4
    %v373 = vrot.slane %v245, 2
    %v374 = vrot.slane %v271, 6
    %v375 = vrot.slane %v284, 4
    %v376 = vrot.slane %v297, 2
    %v377 = vrot.slane %v323, 6
    %v378 = vrot.slane %v336, 4
    %v379 = vrot.slane %v349, 2
    %vm380 = vcmask 1041408
    %v381 = vsel %vm380, %v154, %v368
    %vm382 = vcmask 1045508
    %v383 = vsel %vm382, %v369, %v370
    %vm384 = vcmask 1043456
    %v385 = vsel %vm384, %v381, %v383
    %v386 = vsel %vm380, %v206, %v371
    %v387 = vsel %vm382, %v372, %v373
    %v388 = vsel %vm384, %v386, %v387
    %v389 = vsel %vm380, %v258, %v374
    %v390 = vsel %vm382, %v375, %v376
    %v391 = vsel %vm384, %v389, %v390
    %v392 = vsel %vm380, %v310, %v377
    %v393 = vsel %vm382, %v378, %v379
    %v394 = vsel %vm384, %v392, %v393
    %399 = vst [vmem:[#allocation7] sm:$0xff] %v385
    %400 = vst [vmem:[#allocation7 + $0x8] sm:$0xff] %v388
    %401 = vst [vmem:[#allocation7 + $0x10] sm:$0xff] %v391
    %402 = vst [vmem:[#allocation7 + $0x18] sm:$0xff] %v394
    // Predicated region
    $region18: #{tpu_custom_call.1} parent=1 // pred_check
      _
    $region19: #{tpu_custom_call.1} parent=1 // pred_check_branch
      %404 = sbr.rel (0) target = $region21
    $region20: #{tpu_custom_call.1} parent=1 // pred_region
      %406 = vsyncadd [#allocation4], 0
      %s408 = sshll.u32 [#allocation7], 4
      %s409 = int_to_ptr.vmem [resolvable:$true] %s408
      %s410 = sshll.u32 %s2, 4
      %s411 = int_to_ptr.hbm [resolvable:$true] %s410
      %413 = dma.vmem_to_hbm [thread:$0]  %s409, 512, %s411, [#allocation4]
    $region21: #{tpu_custom_call.1} parent=1 // pred_fallthru
      _
    // Predicated region
    $region22: #{tpu_custom_call.1} parent=1 // pred_check
      _
    $region23: #{tpu_custom_call.1} parent=1 // pred_check_branch
      %415 = sbr.rel (0) target = $region25
    $region24: #{tpu_custom_call.1} parent=1 // pred_region
      %417 = dma.done [#allocation4], 512
    $region25: #{tpu_custom_call.1} parent=1 // pred_fallthru
      _
    %418 = vsyncpa [#allocation3], 1
    %419 = vsyncpa [#allocation6], 1
    %420 = vsyncpa [#allocation4], 1

</llo_original>
